<compile_context>
chip_gen: v7x
topology: tpu7x:2x2x1
jax: 0.10.0
libtpu: 0.0.40
codegen_flags: <defaults>
</compile_context>

<pallas_src>
import functools
from typing import NamedTuple

import jax
import jax.numpy as jnp
from jax.experimental import pallas as pl
from jax.experimental.pallas import tpu as pltpu


class FixedCategorical(NamedTuple):
    """Lightweight JAX analogue of torch.distributions.Categorical."""
    logits: jax.Array  # normalized: x - logsumexp(x, -1, keepdims=True)
    probs: jax.Array   # softmax(x, -1) == exp(logits)


def _categorical_kernel(x_ref, logits_ref, probs_ref):
    """Per-row log-softmax (normalized logits) and softmax (probs)."""
    x = x_ref[...].astype(jnp.float32)
    # Numerically stable: subtract rowwise max.
    m = jnp.max(x, axis=-1, keepdims=True)
    z = x - m
    s = jnp.sum(jnp.exp(z), axis=-1, keepdims=True)
    logits = z - jnp.log(s)                       # log-softmax
    logits_ref[...] = logits.astype(logits_ref.dtype)
    # probs == exp(logits): one extra EUP pass (large slack, kernel is HBM
    # bound) instead of a materialized f32 `e` tile + reciprocal + Newton step.
    # Keeps probs/logits bit-consistent and cuts one [rows, N] f32 intermediate.
    probs_ref[...] = jnp.exp(logits).astype(probs_ref.dtype)


def _round_up(x, m):
    return -(-x // m) * m


def _cdiv(a, b):
    return -(-a // b)


def _tpu_config():
    """Trace-time VMEM capacity + TensorCore-count query (safe fallbacks)."""
    vmem_bytes = 128 * 1024 * 1024
    num_cores = 1
    try:
        info = pltpu.get_tpu_info()
        vmem_bytes = int(getattr(info, "vmem_capacity_bytes", vmem_bytes))
        for attr in ("num_cores", "tensorcores_per_chip", "core_count"):
            v = getattr(info, attr, None)
            if v:
                num_cores = int(v)
                break
    except Exception:
        pass
    # v7x heuristic: 64 MiB VMEM per TC implies the 2-TC megacore layout.
    if vmem_bytes <= 64 * 1024 * 1024:
        num_cores = max(num_cores, 2)
    return vmem_bytes, num_cores


def _choose_block_rows(B, N_pad, per_elem_bytes, vmem_bytes, num_cores, row_align):
    """Pick a batch tile: row_align-multiple rows, generation-gated VMEM target."""
    per_row_bytes = N_pad * per_elem_bytes
    # v5e/v6e (128 MiB VMEM): ~24 MiB working set; v7x (64 MiB): ~18 MiB.
    target = 24 * 1024 * 1024 if vmem_bytes >= 96 * 1024 * 1024 else 18 * 1024 * 1024
    rows_vmem = max(row_align, (target // per_row_bytes) // row_align * row_align)

    # Minimum grid steps: ~4 hides pipeline prologue/epilogue on a single TC;
    # on v7x aim for at least 2 blocks per TensorCore.
    min_blocks = 4 if num_cores <= 1 else max(4, 2 * num_cores)
    rows_for_blocks = max(row_align, _round_up(_cdiv(B, min_blocks), row_align))

    block_rows = min(rows_vmem, rows_for_blocks)

    # Small-B clamp: never exceed the array's row extent (block row dim equal
    # to the full array dim is always legal; no reliance on block padding).
    if block_rows >= B:
        return B

    if num_cores >= 2:
        # Keep the "parallel" grid axis >= 2 and even so both v7x TensorCores
        # get equal work; shrink in row_align steps until that holds.
        br = block_rows
        while br > row_align:
            g = _cdiv(B, br)
            if g >= 2 and g % 2 == 0:
                break
            br -= row_align
        g = _cdiv(B, br)
        if g >= 2 and g % 2 == 0:
            block_rows = br

    return block_rows


@functools.partial(jax.jit, static_argnames=("block_rows", "force_bf16_outputs"))
def categorical_forward(x, block_rows=None, force_bf16_outputs=False):
    """Equivalent of Categorical.forward(x) -> FixedCategorical(logits=x).

    x: [..., N] float array of unnormalized logits (last axis = categories).
    force_bf16_outputs: emit bf16 logits/probs even for f32 input (cuts the
      2/3-of-traffic write stream in half; accuracy/consumer decision).
    """
    orig_shape = x.shape
    N = orig_shape[-1]
    x2d = x.reshape((-1, N))
    B = x2d.shape[0]
    out_dtype = jnp.bfloat16 if force_bf16_outputs else x.dtype

    if N < 128:
        # Tiny action spaces (e.g. 16 discrete actions): a Pallas launch would
        # pay ~0.35 us/step plus masked vst.msk partial stores for < one vreg
        # of useful lanes. Fused XLA is strictly faster; single reduction pass.
        logits32 = jax.nn.log_softmax(x2d.astype(jnp.float32), axis=-1)
        probs32 = jnp.exp(logits32)   # exp(log_softmax) == softmax
        return FixedCategorical(
            logits=logits32.astype(out_dtype).reshape(orig_shape),
            probs=probs32.astype(out_dtype).reshape(orig_shape),
        )

    # Lane-dense padding: non-multiple-of-128 category counts cause masked
    # partial stores on all three streams. Pad with -inf (exp(-inf)=0, row max
    # unaffected by valid finite entries) and slice the outputs back.
    N_pad = _round_up(N, 128)
    if N_pad != N:
        pad = jnp.full((B, N_pad - N), -jnp.inf, dtype=x2d.dtype)
        x_in = jnp.concatenate([x2d, pad], axis=-1)
    else:
        x_in = x2d

    in_itemsize = jnp.dtype(x.dtype).itemsize
    out_itemsize = jnp.dtype(out_dtype).itemsize
    # Double-buffered pipeline: 2 input buffers + 2x2 output buffers, plus ~4
    # f32 intermediates inside the body.
    per_elem_bytes = 2 * in_itemsize + 4 * out_itemsize + 4 * 4
    # bf16 vregs pack [16,128]: align bf16 row tiles to 16 (8 for f32).
    row_align = 16 if min(in_itemsize, out_itemsize) < 4 else 8

    vmem_bytes, num_cores = _tpu_config()
    if block_rows is None:
        block_rows = _choose_block_rows(
            B, N_pad, per_elem_bytes, vmem_bytes, num_cores, row_align)
    else:
        block_rows = max(1, min(int(block_rows), B))

    # Tight, footprint-derived scoped-VMEM budget: footprint + 8 MiB headroom,
    # floored at 16 MiB, capped at 40 MiB on v7x (64 MiB physical) and 64 MiB
    # on 128-MiB-VMEM parts.
    footprint = block_rows * N_pad * per_elem_bytes
    cap = 40 * 1024 * 1024 if vmem_bytes <= 64 * 1024 * 1024 else 64 * 1024 * 1024
    vmem_limit = int(min(cap, max(16 * 1024 * 1024, footprint + 8 * 1024 * 1024)))

    grid = (pl.cdiv(B, block_rows),)
    # N_pad stays whole in the block (reduction axis); it is a multiple of 128,
    # and block_rows is row_align-aligned or equal to the full row extent, so
    # the (8,128) constraint is satisfied.
    blk = pl.BlockSpec((block_rows, N_pad), lambda i: (i, 0))

    logits, probs = pl.pallas_call(
        _categorical_kernel,
        out_shape=(
            jax.ShapeDtypeStruct((B, N_pad), out_dtype),
            jax.ShapeDtypeStruct((B, N_pad), out_dtype),
        ),
        grid_spec=pltpu.PrefetchScalarGridSpec(
            num_scalar_prefetch=0,
            grid=grid,
            in_specs=[blk],
            out_specs=(blk, blk),
        ),
        compiler_params=pltpu.CompilerParams(
            dimension_semantics=("parallel",),
            vmem_limit_bytes=vmem_limit,
        ),
    )(x_in)

    if N_pad != N:
        logits = logits[:, :N]
        probs = probs[:, :N]

    return FixedCategorical(
        logits=logits.reshape(orig_shape),
        probs=probs.reshape(orig_shape),
    )


if __name__ == "__main__":
    key = jax.random.PRNGKey(0)

    # Small lane-dense shape on the Pallas path: (2, 8) batch x 128 categories.
    x = jax.random.normal(key, (2, 8, 128), dtype=jnp.float32)
    dist = categorical_forward(x)
    jax.block_until_ready(dist.logits)
    jax.block_until_ready(dist.probs)

    # Reference check against plain JAX (mirrors torch's normalization).
    ref_logits = x - jax.scipy.special.logsumexp(x, axis=-1, keepdims=True)
    ref_probs = jax.nn.softmax(x, axis=-1)
    assert jnp.allclose(dist.logits, ref_logits, atol=1e-5, rtol=1e-5)
    assert jnp.allclose(dist.probs, ref_probs, atol=1e-5, rtol=1e-5)
    assert jnp.allclose(jnp.sum(dist.probs, axis=-1), 1.0, atol=1e-5)

    # Non-multiple-of-128 category count -> -inf lane padding path.
    x_pad = jax.random.normal(jax.random.PRNGKey(2), (4, 200), dtype=jnp.float32)
    d_pad = categorical_forward(x_pad)
    jax.block_until_ready(d_pad.probs)
    assert d_pad.logits.shape == x_pad.shape and d_pad.probs.shape == x_pad.shape
    assert jnp.allclose(d_pad.probs, jax.nn.softmax(x_pad, axis=-1),
                        atol=1e-5, rtol=1e-5)
    assert jnp.allclose(jnp.sum(d_pad.probs, axis=-1), 1.0, atol=1e-5)

    # Tiny action-space case (typical RL policy head, 8x16): XLA fallback path.
    x_small = jax.random.normal(jax.random.PRNGKey(1), (8, 16), dtype=jnp.float32)
    d_small = categorical_forward(x_small)
    jax.block_until_ready(d_small.probs)
    assert jnp.allclose(d_small.probs, jax.nn.softmax(x_small, axis=-1),
                        atol=1e-5, rtol=1e-5)
    assert jnp.allclose(jnp.sum(d_small.probs, axis=-1), 1.0, atol=1e-5)

    # bf16 input -> bf16 outputs (halves HBM write traffic); reductions in f32.
    x_bf16 = x.astype(jnp.bfloat16)
    d_bf16 = categorical_forward(x_bf16)
    jax.block_until_ready(d_bf16.probs)
    assert d_bf16.logits.dtype == jnp.bfloat16
    assert d_bf16.probs.dtype == jnp.bfloat16
    assert jnp.allclose(
        jnp.sum(d_bf16.probs.astype(jnp.float32), axis=-1), 1.0, atol=2e-2)

    print("KERNEL_OK")
</pallas_src>

<mosaic_0001>
module attributes {stable_mosaic.version = 11 : i64} {
  func.func @_categorical_kernel(%arg0: i32, %arg1: memref<8x128xf32, #tpu.memory_space<vmem>>, %arg2: memref<8x128xf32, #tpu.memory_space<vmem>>, %arg3: memref<8x128xf32, #tpu.memory_space<vmem>>) attributes {dimension_semantics = [#tpu.dimension_semantics<parallel>], iteration_bounds = array<i64: 2>, scalar_prefetch = 0 : i64, scratch_operands = 0 : i64, tpu.core_type = #tpu.core_type<tc>, window_params = [{transform_indices = @transform_0, window_bounds = array<i64: 8, 128>}, {transform_indices = @transform_1, window_bounds = array<i64: 8, 128>}, {transform_indices = @transform_2, window_bounds = array<i64: 8, 128>}]} {
    %c0 = arith.constant 0 : index
    %c0_0 = arith.constant 0 : index
    %0 = vector.load %arg1[%c0, %c0_0] : memref<8x128xf32, #tpu.memory_space<vmem>>, vector<8x128xf32>
    %cst = arith.constant dense<0xFF800000> : vector<8xf32>
    %1 = vector.multi_reduction <maximumf>, %0, %cst [1] : vector<8x128xf32> to vector<8xf32>
    %2 = vector.shape_cast %1 : vector<8xf32> to vector<8x1xf32>
    %3 = vector.broadcast %2 : vector<8x1xf32> to vector<8x128xf32>
    %4 = arith.subf %0, %3 : vector<8x128xf32>
    %5 = math.exp %4 : vector<8x128xf32>
    %cst_1 = arith.constant dense<0.000000e+00> : vector<8xf32>
    %6 = vector.multi_reduction <add>, %5, %cst_1 [1] : vector<8x128xf32> to vector<8xf32>
    %7 = vector.shape_cast %6 : vector<8xf32> to vector<8x1xf32>
    %8 = math.log %7 : vector<8x1xf32>
    %9 = vector.broadcast %8 : vector<8x1xf32> to vector<8x128xf32>
    %10 = arith.subf %4, %9 : vector<8x128xf32>
    %c0_2 = arith.constant 0 : index
    %c0_3 = arith.constant 0 : index
    %11 = vector.load %arg2[%c0_2, %c0_3] : memref<8x128xf32, #tpu.memory_space<vmem>>, vector<8x128xf32>
    tpu.vector_store %arg2[%c0_2, %c0_3], %10 {strides = array<i32>} : memref<8x128xf32, #tpu.memory_space<vmem>>, vector<8x128xf32>,
    %12 = math.exp %10 : vector<8x128xf32>
    %c0_4 = arith.constant 0 : index
    %c0_5 = arith.constant 0 : index
    %13 = vector.load %arg3[%c0_4, %c0_5] : memref<8x128xf32, #tpu.memory_space<vmem>>, vector<8x128xf32>
    tpu.vector_store %arg3[%c0_4, %c0_5], %12 {strides = array<i32>} : memref<8x128xf32, #tpu.memory_space<vmem>>, vector<8x128xf32>,
    return
  }
  func.func @transform_0(%arg0: i32) -> (i32, i32) {
    %c0_i32 = arith.constant 0 : i32
    %c0_i32_0 = arith.constant 0 : i32
    return %arg0, %c0_i32 : i32, i32
  }
  func.func @transform_1(%arg0: i32) -> (i32, i32) {
    %c0_i32 = arith.constant 0 : i32
    %c0_i32_0 = arith.constant 0 : i32
    return %arg0, %c0_i32 : i32, i32
  }
  func.func @transform_2(%arg0: i32) -> (i32, i32) {
    %c0_i32 = arith.constant 0 : i32
    %c0_i32_0 = arith.constant 0 : i32
    return %arg0, %c0_i32 : i32, i32
  }
}

</mosaic_0001>

<llo_original>
// kernel: categorical_forward.1
$region0: #{categorical_forward.1}
  #allocation0 [shape = 'u32[]', space=smem, size = 0x4, offset = 0x4, fixed_abs, tag = 'smem constant byte address 0x4 - core index']
  #allocation1 [shape = 'u32[144,128]{1,0:T(1,128)}', space=vmem, size = 0x12000, scoped, tag = 'internal scratch']
  %s0 = inlined_call_operand.hbm [shape: f32[16,128], index: 0, kind: input, shape index: {}]
  %s1 = inlined_call_operand.hbm [shape: f32[16,128], index: 1, kind: output, shape index: {0}]
  %s2 = inlined_call_operand.hbm [shape: f32[16,128], index: 2, kind: output, shape index: {1}]
  %3 = xla_tuple %s1, %s2
  %s4 = sld [smem:[#allocation0]]
  $region49: #{categorical_forward.1} parent=0
    _
  %s6 = ssub.s32 1, %s4
  %s7 = scalar_select 0, %s6, %s4
  $region1: #{categorical_forward.1} parent=0
    #allocation2 [shape = 'u8[8192]{0}', space=vmem, size = 0x2000, scoped, tag = 'input window, operand 0']
    #allocation3 [shape = 's32[2]{0}', space=sflag, size = 0x8, scoped, tag = 'scoped memory for categorical_forward.1']
    #allocation4 [shape = 's32[2]{0}', space=sflag, size = 0x8, scoped, tag = 'scoped memory for categorical_forward.1']
    #allocation5 [shape = 'u8[8192]{0}', space=vmem, size = 0x2000, scoped, tag = 'output window, operand 0']
    #allocation6 [shape = 'u8[8192]{0}', space=vmem, size = 0x2000, scoped, tag = 'output window, operand 1']
    #allocation7 [shape = 's32[2]{0}', space=sflag, size = 0x8, scoped, tag = 'scoped memory for categorical_forward.1']
    %8 = vsyncpa [#allocation3], 0
    %s9 = scalar_lea.sflag [#allocation3], 1
    %10 = vsyncpa %s9, 0
    %11 = vsyncpa [#allocation4], 0
    %s12 = scalar_lea.sflag [#allocation4], 1
    %13 = vsyncpa %s12, 0
    %14 = vsyncpa [#allocation7], 0
    %s15 = scalar_lea.sflag [#allocation7], 1
    %16 = vsyncpa %s15, 0
    loop: start=0, step=1, limit=4
    $region2: #{categorical_forward.1} parent=1 // loop_pre_header
      _
    $region3: #{categorical_forward.1} parent=1 // loop_header
      %s18 = sphi 0, %s22
      %p19 = scmp.ge.s32.totalorder %s18, 4
      %s28 = sphi 0, %s30
      %s31 = sphi 0, %s28
      %s32 = sphi 0, %s31
      %s48 = sphi 0, %s32
      %s54 = sphi 0, %s56
      %s57 = sphi 0, %s54
      %s58 = sphi 0, %s57
      %s74 = sphi 0, %s58
      %s80 = sphi 0, %s82
      %s83 = sphi 0, %s80
      %s84 = sphi 0, %s83
      %s100 = sphi 0, %s84
    $region4: #{categorical_forward.1} parent=1 // loop_header_branch
      %21 = sbr.rel (%p19) target = $region8
    $region5: #{categorical_forward.1} parent=1 // loop_body
      %s23 = ssub.s32 %s18, 1
      %s24 = ssub.s32 %s18, 2
      %s25 = sadd.s32 %s18, 1
      %s26 = ssub.s32 %s18, %s25
      %p27 = scmp.eq.s32.totalorder %s26, 0
      %s29 = sadd.s32 %s28, 1
      %s30 = scalar_select %p27, %s28, %s29
      %p33 = pneg %p27
      %p34 = scmp.eq.s32.totalorder %s18, 1
      %p35 = por %p33, %p34
      %p36 = scmp.ne.s32.totalorder %s28, %s31
      %p37 = scmp.eq.s32.totalorder %s18, 0
      %p38 = por %p36, %p37
      %p39 = scmp.ne.s32.totalorder %s28, %s31
      %p40 = scmp.eq.s32.totalorder %s23, 1
      %p41 = por %p39, %p40
      %p42 = scmp.ne.s32.totalorder %s31, %s32
      %p43 = scmp.eq.s32.totalorder %s23, 0
      %p44 = por %p42, %p43
      %p45 = scmp.ne.s32.totalorder %s31, %s32
      %p46 = scmp.eq.s32.totalorder %s24, 1
      %p47 = por %p45, %p46
      %p49 = scmp.ne.s32.totalorder %s32, %s48
      %p50 = scmp.eq.s32.totalorder %s24, 0
      %p51 = por %p49, %p50
      %s52 = ssub.s32 %s18, %s25
      %p53 = scmp.eq.s32.totalorder %s52, 0
      %s55 = sadd.s32 %s54, 1
      %s56 = scalar_select %p53, %s54, %s55
      %p59 = pneg %p53
      %p60 = scmp.eq.s32.totalorder %s18, 1
      %p61 = por %p59, %p60
      %p62 = scmp.ne.s32.totalorder %s54, %s57
      %p63 = scmp.eq.s32.totalorder %s18, 0
      %p64 = por %p62, %p63
      %p65 = scmp.ne.s32.totalorder %s54, %s57
      %p66 = scmp.eq.s32.totalorder %s23, 1
      %p67 = por %p65, %p66
      %p68 = scmp.ne.s32.totalorder %s57, %s58
      %p69 = scmp.eq.s32.totalorder %s23, 0
      %p70 = por %p68, %p69
      %p71 = scmp.ne.s32.totalorder %s57, %s58
      %p72 = scmp.eq.s32.totalorder %s24, 1
      %p73 = por %p71, %p72
      %p75 = scmp.ne.s32.totalorder %s58, %s74
      %p76 = scmp.eq.s32.totalorder %s24, 0
      %p77 = por %p75, %p76
      %s78 = ssub.s32 %s18, %s25
      %p79 = scmp.eq.s32.totalorder %s78, 0
      %s81 = sadd.s32 %s80, 1
      %s82 = scalar_select %p79, %s80, %s81
      %p85 = pneg %p79
      %p86 = scmp.eq.s32.totalorder %s18, 1
      %p87 = por %p85, %p86
      %p88 = scmp.ne.s32.totalorder %s80, %s83
      %p89 = scmp.eq.s32.totalorder %s18, 0
      %p90 = por %p88, %p89
      %p91 = scmp.ne.s32.totalorder %s80, %s83
      %p92 = scmp.eq.s32.totalorder %s23, 1
      %p93 = por %p91, %p92
      %p94 = scmp.ne.s32.totalorder %s83, %s84
      %p95 = scmp.eq.s32.totalorder %s23, 0
      %p96 = por %p94, %p95
      %p97 = scmp.ne.s32.totalorder %s83, %s84
      %p98 = scmp.eq.s32.totalorder %s24, 1
      %p99 = por %p97, %p98
      %p101 = scmp.ne.s32.totalorder %s84, %s100
      %p102 = scmp.eq.s32.totalorder %s24, 0
      %p103 = por %p101, %p102
      %p104 = scmp.le.s32.totalorder 1, %s18
      %p105 = scmp.lt.s32.totalorder %s18, 3
      %p106 = pnand %p104, %p105
      %p107 = pneg %p106
      // Predicated region
      $region9: #{categorical_forward.1} parent=5 // pred_check
        _
      $region10: #{categorical_forward.1} parent=5 // pred_check_branch
        %109 = sbr.rel (%p106) target = $region12
      $region11: #{categorical_forward.1} parent=5 // pred_region
        %s110 = ssub.s32 %s18, 1
      $region12: #{categorical_forward.1} parent=5 // pred_fallthru
        _
      %p111 = scmp.lt.s32.totalorder %s18, 2
      // Predicated region
      $region13: #{categorical_forward.1} parent=5 // pred_check
        %p112 = pneg %p111
      $region14: #{categorical_forward.1} parent=5 // pred_check_branch
        %114 = sbr.rel (%p112) target = $region16
      $region15: #{categorical_forward.1} parent=5 // pred_region
        // Predicated region
        $region17: #{categorical_forward.1} parent=15 // pred_check
          %p115 = pneg %p38
        $region18: #{categorical_forward.1} parent=15 // pred_check_branch
          %117 = sbr.rel (%p115) target = $region20
        $region19: #{categorical_forward.1} parent=15 // pred_region
          %s118 = sand.u32 %s28, 1
          %s119 = scalar_lea.sflag [#allocation3], %s118
          %s120 = sand.u32 %s28, 1
          %s121 = smul.addr %s120, 8
          %s122 = scalar_lea.vmem [#allocation2], %s121
          %s124 = ssub.s32 128, 128
          %125 = vsyncadd %s119, %s124
          %s126 = smul.addr %s18, 128
          %s127 = scalar_lea.hbm %s0, %s126
          %s129 = sshll.u32 %s122, 4
          %s130 = int_to_ptr.vmem [resolvable:$true] %s129
          %132 = dma.hbm_to_vmem [thread:$0]  %s127, 128, %s130, %s119
        $region20: #{categorical_forward.1} parent=15 // pred_fallthru
          _
      $region16: #{categorical_forward.1} parent=5 // pred_fallthru
        _
      %p133 = scmp.le.s32.totalorder 1, %s18
      %p134 = scmp.lt.s32.totalorder %s18, 3
      %p135 = pnand %p133, %p134
      %p136 = pneg %p135
      // Predicated region
      $region21: #{categorical_forward.1} parent=5 // pred_check
        _
      $region22: #{categorical_forward.1} parent=5 // pred_check_branch
        %138 = sbr.rel (%p135) target = $region24
      $region23: #{categorical_forward.1} parent=5 // pred_region
        %s139 = ssub.s32 %s18, 1
        %s140 = sand.u32 %s31, 1
        %s141 = scalar_lea.sflag [#allocation3], %s140
        %s142 = sand.u32 %s31, 1
        %s143 = smul.addr %s142, 8
        %s144 = scalar_lea.vmem [#allocation2], %s143
        // Predicated region
        $region25: #{categorical_forward.1} parent=23 // pred_check
          %p145 = pneg %p44
        $region26: #{categorical_forward.1} parent=23 // pred_check_branch
          %147 = sbr.rel (%p145) target = $region28
        $region27: #{categorical_forward.1} parent=23 // pred_region
          %148 = dma.done %s141, 128
        $region28: #{categorical_forward.1} parent=23 // pred_fallthru
          _
        %s149 = sand.u32 %s31, 1
        %s150 = scalar_lea.sflag [#allocation3], %s149
        %s151 = sand.u32 %s31, 1
        %s152 = smul.addr %s151, 8
        %s153 = scalar_lea.vmem [#allocation2], %s152
        %p154 = pneg %p44
        %p155 = pneg %p41
        %p156 = pneg %p70
        %p157 = pneg %p67
        %s158 = sand.u32 %s57, 1
        %s159 = scalar_lea.sflag [#allocation4], %s158
        %s160 = sand.u32 %s57, 1
        %s161 = smul.addr %s160, 8
        %s162 = scalar_lea.vmem [#allocation5], %s161
        %p163 = pneg %p96
        %p164 = pneg %p93
        %s165 = sand.u32 %s83, 1
        %s166 = scalar_lea.sflag [#allocation7], %s165
        %s167 = sand.u32 %s83, 1
        %s168 = smul.addr %s167, 8
        %s169 = scalar_lea.vmem [#allocation6], %s168
        %v170 = vld [vmem:[%s144] sm:$0xff]
        %171 = vmax.xlane.f32.xlu0 %v170
        %v172 = vpop.xlane.xlu0 %171
        %v173 = vsub.f32 %v170, %v172
        %v174 = vmul.f32 %v173, 1.442695
        %v175 = vpow.pop %v174
        %176 = vadd.xlane.f32.xlu0 %v175
        %v177 = vpop.xlane.xlu0 %176
        %v178 = vlog2.pop %v177
        %v179 = vmul.f32 %v178, 0.6931472
        %v180 = vsub.f32 %v173, %v179
        %181 = vst [vmem:[%s162] sm:$0xff] %v180
        %v182 = vmul.f32 %v180, 1.442695
        %v183 = vpow.pop %v182
        %184 = vst [vmem:[%s169] sm:$0xff] %v183
        %s185 = sand.u32 %s57, 1
        %s186 = scalar_lea.sflag [#allocation4], %s185
        %s187 = sand.u32 %s57, 1
        %s188 = smul.addr %s187, 8
        %s189 = scalar_lea.vmem [#allocation5], %s188
        %s190 = sand.u32 %s83, 1
        %s191 = scalar_lea.sflag [#allocation7], %s190
        %s192 = sand.u32 %s83, 1
        %s193 = smul.addr %s192, 8
        %s194 = scalar_lea.vmem [#allocation6], %s193
        // Predicated region
        $region29: #{categorical_forward.1} parent=23 // pred_check
          %p195 = pneg %p67
        $region30: #{categorical_forward.1} parent=23 // pred_check_branch
          %197 = sbr.rel (%p195) target = $region32
        $region31: #{categorical_forward.1} parent=23 // pred_region
          %s199 = ssub.s32 128, 128
          %200 = vsyncadd %s186, %s199
          %s201 = smul.addr %s23, 128
          %s202 = scalar_lea.hbm %s1, %s201
          %s204 = sshll.u32 %s189, 4
          %s205 = int_to_ptr.vmem [resolvable:$true] %s204
          %207 = dma.vmem_to_hbm [thread:$0]  %s205, 128, %s202, %s186
        $region32: #{categorical_forward.1} parent=23 // pred_fallthru
          _
        // Predicated region
        $region33: #{categorical_forward.1} parent=23 // pred_check
          %p208 = pneg %p93
        $region34: #{categorical_forward.1} parent=23 // pred_check_branch
          %210 = sbr.rel (%p208) target = $region36
        $region35: #{categorical_forward.1} parent=23 // pred_region
          %s212 = ssub.s32 128, 128
          %213 = vsyncadd %s191, %s212
          %s214 = smul.addr %s23, 128
          %s215 = scalar_lea.hbm %s2, %s214
          %s217 = sshll.u32 %s194, 4
          %s218 = int_to_ptr.vmem [resolvable:$true] %s217
          %220 = dma.vmem_to_hbm [thread:$0]  %s218, 128, %s215, %s191
        $region36: #{categorical_forward.1} parent=23 // pred_fallthru
          _
      $region24: #{categorical_forward.1} parent=5 // pred_fallthru
        _
      %p221 = scmp.le.s32.totalorder 2, %s18
      // Predicated region
      $region37: #{categorical_forward.1} parent=5 // pred_check
        %p222 = pneg %p221
      $region38: #{categorical_forward.1} parent=5 // pred_check_branch
        %224 = sbr.rel (%p222) target = $region40
      $region39: #{categorical_forward.1} parent=5 // pred_region
        %s225 = ssub.s32 %s18, 2
        // Predicated region
        $region41: #{categorical_forward.1} parent=39 // pred_check
          %p226 = pneg %p73
        $region42: #{categorical_forward.1} parent=39 // pred_check_branch
          %228 = sbr.rel (%p226) target = $region44
        $region43: #{categorical_forward.1} parent=39 // pred_region
          %s229 = sand.u32 %s58, 1
          %s230 = scalar_lea.sflag [#allocation4], %s229
          %s231 = sand.u32 %s58, 1
          %s232 = smul.addr %s231, 8
          %s233 = scalar_lea.vmem [#allocation5], %s232
          %234 = dma.done %s230, 128
        $region44: #{categorical_forward.1} parent=39 // pred_fallthru
          _
        // Predicated region
        $region45: #{categorical_forward.1} parent=39 // pred_check
          %p235 = pneg %p99
        $region46: #{categorical_forward.1} parent=39 // pred_check_branch
          %237 = sbr.rel (%p235) target = $region48
        $region47: #{categorical_forward.1} parent=39 // pred_region
          %s238 = sand.u32 %s84, 1
          %s239 = scalar_lea.sflag [#allocation7], %s238
          %s240 = sand.u32 %s84, 1
          %s241 = smul.addr %s240, 8
          %s242 = scalar_lea.vmem [#allocation6], %s241
          %243 = dma.done %s239, 128
        $region48: #{categorical_forward.1} parent=39 // pred_fallthru
          _
      $region40: #{categorical_forward.1} parent=5 // pred_fallthru
        _
    $region6: #{categorical_forward.1} parent=1 // loop_footer
      %s22 = sadd.s32 1, %s18
    $region7: #{categorical_forward.1} parent=1 // loop_footer_branch
      %17 = sbr.rel target = $region3
    $region8: #{categorical_forward.1} parent=1 // loop_exit
      _
    %244 = vsyncpa [#allocation3], 1
    %s245 = scalar_lea.sflag [#allocation3], 1
    %246 = vsyncpa %s245, 1
    %247 = vsyncpa [#allocation4], 1
    %s248 = scalar_lea.sflag [#allocation4], 1
    %249 = vsyncpa %s248, 1
    %250 = vsyncpa [#allocation7], 1
    %s251 = scalar_lea.sflag [#allocation7], 1
    %252 = vsyncpa %s251, 1

</llo_original>
